<compile_context>
chip_gen: v6e
topology: v6e:2x2x1
jax: 0.10.0
libtpu: 0.0.40
codegen_flags: <defaults>
</compile_context>

<pallas_src>
import functools

import jax
import jax.numpy as jnp
from jax.experimental import pallas as pl
from jax.experimental.pallas import tpu as pltpu


def _mlp_kernel(x_ref, w1_ref, b1_ref, w2_ref, b2_ref, o_ref):
    # Layer 1 on the MXU: (TB, D) @ (D, 512) -> (TB, 512), f32 accumulate.
    h = jnp.dot(x_ref[...], w1_ref[...], preferred_element_type=jnp.float32)
    h = jnp.maximum(h + b1_ref[...], 0.0)                      # bias + ReLU (VPU)

    # Layer 2 (500 -> 1): an N=1 MXU matmul wastes 127/128 result lanes, so do it
    # as a VPU multiply + lane reduction instead.  b2 is an SMEM scalar.
    z = jnp.sum(h * w2_ref[...], axis=-1, keepdims=True) + b2_ref[0]   # (TB, 1)

    # Sigmoid: exp goes to the EUP; exact divide kept because z is only (TB, 1)
    # wide (negligible VALU work) and approx reciprocal would not hold 1e-5.
    o_ref[...] = (1.0 / (1.0 + jnp.exp(-z))).astype(o_ref.dtype)


@functools.partial(jax.jit, static_argnames=("block_b",))
def logistic_regression_forward(x, w1, b1, w2, b2, *, block_b=512):
    """x: (B, D) f32; w1: (D, H); b1: (H,); w2: (H, 1); b2: (1,)."""
    B, D = x.shape
    H = w1.shape[1]

    # Pad hidden dim to a multiple of 128 lanes (500 -> 512).
    H_pad = pl.cdiv(H, 128) * 128
    if H_pad != H:
        w1 = jnp.pad(w1, ((0, 0), (0, H_pad - H)))
        b1 = jnp.pad(b1, (0, H_pad - H))
        w2 = jnp.pad(w2, ((0, H_pad - H), (0, 0)))
    b1_row = b1.reshape(1, H_pad)
    w2_row = w2.reshape(1, H_pad)            # (H,1) column stored as a lane row
    b2_smem = b2.reshape(1).astype(jnp.float32)

    # Batch tiling: TB rows per grid step (multiple of 8 sublanes); pad B up.
    TB = min(block_b, pl.cdiv(B, 8) * 8)
    B_pad = pl.cdiv(B, TB) * TB
    if B_pad != B:
        x = jnp.pad(x, ((0, B_pad - B), (0, 0)))
    grid = (B_pad // TB,)

    out = pl.pallas_call(
        _mlp_kernel,
        out_shape=jax.ShapeDtypeStruct((B_pad, 1), jnp.float32),
        grid_spec=pltpu.PrefetchScalarGridSpec(
            num_scalar_prefetch=0,
            grid=grid,
            in_specs=[
                # x is tiled over the batch grid and double-buffered by Pallas.
                pl.BlockSpec((TB, D), lambda i: (i, 0)),
                # Weights/biases: constant block index -> fetched once, VMEM-resident.
                pl.BlockSpec((D, H_pad), lambda i: (0, 0)),
                pl.BlockSpec((1, H_pad), lambda i: (0, 0)),
                pl.BlockSpec((1, H_pad), lambda i: (0, 0)),
                # b2 as a whole-array SMEM scalar (no padded (1,1) VMEM tile).
                pl.BlockSpec(memory_space=pltpu.MemorySpace.SMEM),
            ],
            out_specs=pl.BlockSpec((TB, 1), lambda i: (i, 0)),
        ),
        compiler_params=pltpu.CompilerParams(
            # Batch axis is independent -> shards across both TensorCores on v7x;
            # harmless on v5e/v6e.
            dimension_semantics=("parallel",),
        ),
    )(x, w1, b1_row, w2_row, b2_smem)
    return out[:B]


def init_params(key, input_size, hidden=500):
    """Deterministic init mimicking torch.nn.Linear defaults: U(-1/sqrt(fan_in), 1/sqrt(fan_in))."""
    k1, k2, k3, k4 = jax.random.split(key, 4)
    bound1 = 1.0 / jnp.sqrt(jnp.float32(input_size))
    bound2 = 1.0 / jnp.sqrt(jnp.float32(hidden))
    w1 = jax.random.uniform(k1, (input_size, hidden), jnp.float32, -bound1, bound1)
    b1 = jax.random.uniform(k2, (hidden,), jnp.float32, -bound1, bound1)
    w2 = jax.random.uniform(k3, (hidden, 1), jnp.float32, -bound2, bound2)
    b2 = jax.random.uniform(k4, (1,), jnp.float32, -bound2, bound2)
    return w1, b1, w2, b2


if __name__ == "__main__":
    key = jax.random.PRNGKey(0)
    k_x, k_xl, k_p = jax.random.split(key, 3)

    INPUT_SIZE, HIDDEN = 32, 500
    w1, b1, w2, b2 = init_params(k_p, INPUT_SIZE, HIDDEN)

    def reference(x):
        h = jnp.maximum(x @ w1 + b1, 0.0)
        # Second Linear at HIGHEST so the f32 reference matches the kernel's
        # exact-f32 lane reduction (TPU DEFAULT matmul precision may drop to bf16).
        z = jnp.dot(h, w2, precision=jax.lax.Precision.HIGHEST) + b2
        return jax.nn.sigmoid(z)

    # Small batch matching the PyTorch spec shapes: single grid step.
    x_small = jax.random.normal(k_x, (8, INPUT_SIZE), jnp.float32)
    out_small = jax.block_until_ready(
        logistic_regression_forward(x_small, w1, b1, w2, b2))
    assert out_small.shape == (8, 1)
    assert jnp.allclose(out_small, reference(x_small), atol=1e-5, rtol=1e-5)

    # Larger (ragged) batch to exercise the tiled, pipelined, parallel grid path.
    x_large = jax.random.normal(k_xl, (1000, INPUT_SIZE), jnp.float32)
    out_large = jax.block_until_ready(
        logistic_regression_forward(x_large, w1, b1, w2, b2))
    assert out_large.shape == (1000, 1)
    assert jnp.allclose(out_large, reference(x_large), atol=1e-5, rtol=1e-5)

    print("KERNEL_OK")
</pallas_src>

<mosaic_0001>
module attributes {stable_mosaic.version = 11 : i64} {
  func.func @_mlp_kernel(%arg0: i32, %arg1: memref<8x32xf32, #tpu.memory_space<vmem>>, %arg2: memref<32x512xf32, #tpu.memory_space<vmem>>, %arg3: memref<1x512xf32, #tpu.memory_space<vmem>>, %arg4: memref<1x512xf32, #tpu.memory_space<vmem>>, %arg5: memref<1xf32, #tpu.memory_space<smem>>, %arg6: memref<8x1xf32, #tpu.memory_space<vmem>>) attributes {dimension_semantics = [#tpu.dimension_semantics<parallel>], iteration_bounds = array<i64: 1>, scalar_prefetch = 0 : i64, scratch_operands = 0 : i64, tpu.core_type = #tpu.core_type<tc>, window_params = [{transform_indices = @transform_0, window_bounds = array<i64: 8, 32>}, {pipeline_mode = #tpu.pipeline_mode<synchronous>, transform_indices = @transform_1, window_bounds = array<i64: 32, 512>}, {pipeline_mode = #tpu.pipeline_mode<synchronous>, transform_indices = @transform_2, window_bounds = array<i64: 1, 512>}, {pipeline_mode = #tpu.pipeline_mode<synchronous>, transform_indices = @transform_3, window_bounds = array<i64: 1, 512>}, {transform_indices = @transform_4, window_bounds = array<i64: 1>}, {transform_indices = @transform_5, window_bounds = array<i64: 8, 1>}]} {
    %c0 = arith.constant 0 : index
    %c0_0 = arith.constant 0 : index
    %0 = vector.load %arg1[%c0, %c0_0] : memref<8x32xf32, #tpu.memory_space<vmem>>, vector<8x32xf32>
    %c0_1 = arith.constant 0 : index
    %c0_2 = arith.constant 0 : index
    %1 = vector.load %arg2[%c0_1, %c0_2] : memref<32x512xf32, #tpu.memory_space<vmem>>, vector<32x512xf32>
    %cst = arith.constant dense<0.000000e+00> : vector<8x512xf32>
    %2 = tpu.matmul %0, %1, %cst {dimension_numbers = #tpu.dot_dimension_numbers<[1], [0], [0], [1], [0, 0, 1, 1], [], []>} : vector<8x32xf32>, vector<32x512xf32>, vector<8x512xf32> -> vector<8x512xf32>
    %c0_3 = arith.constant 0 : index
    %c0_4 = arith.constant 0 : index
    %3 = vector.load %arg3[%c0_3, %c0_4] : memref<1x512xf32, #tpu.memory_space<vmem>>, vector<1x512xf32>
    %4 = vector.broadcast %3 : vector<1x512xf32> to vector<8x512xf32>
    %5 = arith.addf %2, %4 : vector<8x512xf32>
    %cst_5 = arith.constant 0.000000e+00 : f32
    %6 = vector.broadcast %cst_5 : f32 to vector<8x512xf32>
    %7 = arith.maximumf %5, %6 : vector<8x512xf32>
    %c0_6 = arith.constant 0 : index
    %c0_7 = arith.constant 0 : index
    %8 = vector.load %arg4[%c0_6, %c0_7] : memref<1x512xf32, #tpu.memory_space<vmem>>, vector<1x512xf32>
    %9 = vector.broadcast %8 : vector<1x512xf32> to vector<8x512xf32>
    %10 = arith.mulf %7, %9 : vector<8x512xf32>
    %cst_8 = arith.constant dense<0.000000e+00> : vector<8xf32>
    %11 = vector.multi_reduction <add>, %10, %cst_8 [1] : vector<8x512xf32> to vector<8xf32>
    %12 = vector.shape_cast %11 : vector<8xf32> to vector<8x1xf32>
    %c0_9 = arith.constant 0 : index
    %13 = memref.load %arg5[%c0_9] : memref<1xf32, #tpu.memory_space<smem>>
    %14 = vector.broadcast %13 : f32 to vector<8x1xf32>
    %15 = arith.addf %12, %14 : vector<8x1xf32>
    %cst_10 = arith.constant 0.000000e+00 : f32
    %16 = vector.broadcast %cst_10 : f32 to vector<8x1xf32>
    %17 = arith.subf %16, %15 : vector<8x1xf32>
    %18 = math.exp %17 : vector<8x1xf32>
    %cst_11 = arith.constant 1.000000e+00 : f32
    %19 = vector.broadcast %cst_11 : f32 to vector<8x1xf32>
    %20 = arith.addf %19, %18 : vector<8x1xf32>
    %cst_12 = arith.constant 1.000000e+00 : f32
    %21 = vector.broadcast %cst_12 : f32 to vector<8x1xf32>
    %22 = arith.divf %21, %20 : vector<8x1xf32>
    %c0_13 = arith.constant 0 : index
    %c0_14 = arith.constant 0 : index
    %23 = vector.load %arg6[%c0_13, %c0_14] : memref<8x1xf32, #tpu.memory_space<vmem>>, vector<8x1xf32>
    tpu.vector_store %arg6[%c0_13, %c0_14], %22 {strides = array<i32>} : memref<8x1xf32, #tpu.memory_space<vmem>>, vector<8x1xf32>,
    return
  }
  func.func @transform_0(%arg0: i32) -> (i32, i32) {
    %c0_i32 = arith.constant 0 : i32
    %c0_i32_0 = arith.constant 0 : i32
    return %arg0, %c0_i32 : i32, i32
  }
  func.func @transform_1(%arg0: i32) -> (i32, i32) {
    %c0_i32 = arith.constant 0 : i32
    %c0_i32_0 = arith.constant 0 : i32
    %c0_i32_1 = arith.constant 0 : i32
    return %c0_i32, %c0_i32_0 : i32, i32
  }
  func.func @transform_2(%arg0: i32) -> (i32, i32) {
    %c0_i32 = arith.constant 0 : i32
    %c0_i32_0 = arith.constant 0 : i32
    %c0_i32_1 = arith.constant 0 : i32
    return %c0_i32, %c0_i32_0 : i32, i32
  }
  func.func @transform_3(%arg0: i32) -> (i32, i32) {
    %c0_i32 = arith.constant 0 : i32
    %c0_i32_0 = arith.constant 0 : i32
    %c0_i32_1 = arith.constant 0 : i32
    return %c0_i32, %c0_i32_0 : i32, i32
  }
  func.func @transform_4(%arg0: i32) -> i32 {
    %c0_i32 = arith.constant 0 : i32
    %c0_i32_0 = arith.constant 0 : i32
    return %c0_i32 : i32
  }
  func.func @transform_5(%arg0: i32) -> (i32, i32) {
    %c0_i32 = arith.constant 0 : i32
    %c0_i32_0 = arith.constant 0 : i32
    return %arg0, %c0_i32 : i32, i32
  }
}

</mosaic_0001>

<llo_original>
// kernel: logistic_regression_forward.1
$region0: #{logistic_regression_forward.1}
  #allocation0 [shape = 'u32[]', space=smem, size = 0x4, offset = 0x4, fixed_abs, tag = 'smem constant byte address 0x4 - core index']
  #allocation1 [shape = 'u32[144,128]{1,0:T(1,128)}', space=vmem, size = 0x12000, scoped, tag = 'internal scratch']
  #allocation2 [shape = 'f32[1]{0:T(128)S(6)}', space=smem, size = 0x200, scoped, tag = 'scoped memory for logistic_regression_forward.1']
  %s0 = inlined_call_operand.vmem [shape: f32[8,32], index: 0, kind: input, shape index: {}]
  %s1 = inlined_call_operand.vmem [shape: f32[32,512], index: 1, kind: input, shape index: {}]
  %s2 = inlined_call_operand.vmem [shape: f32[1,512], index: 2, kind: input, shape index: {}]
  %s3 = inlined_call_operand.vmem [shape: f32[1,512], index: 3, kind: input, shape index: {}]
  %s4 = inlined_call_operand.<no memory space> [shape: f32[1], index: 4, kind: input, shape index: {}]
  %s5 = inlined_call_operand.vmem [shape: f32[8,1], index: 5, kind: output, shape index: {}]
  %s6 = sld [smem:[#allocation0]]
  $region30: #{logistic_regression_forward.1} parent=0
    _
  %s8 = ssub.s32 1, %s6
  %s9 = scalar_select 0, %s8, %s6
  %10 = sst [smem:[#allocation2]] %s4
  // Predicated region
  $region2: #{logistic_regression_forward.1} parent=0 // pred_check
    _
  $region3: #{logistic_regression_forward.1} parent=0 // pred_check_branch
    %12 = sbr.rel (0) target = $region5
  $region4: #{logistic_regression_forward.1} parent=0 // pred_region
    _
  $region5: #{logistic_regression_forward.1} parent=0 // pred_fallthru
    _
  // Predicated region
  $region6: #{logistic_regression_forward.1} parent=0 // pred_check
    _
  $region7: #{logistic_regression_forward.1} parent=0 // pred_check_branch
    %14 = sbr.rel (0) target = $region9
  $region8: #{logistic_regression_forward.1} parent=0 // pred_region
    _
  $region9: #{logistic_regression_forward.1} parent=0 // pred_fallthru
    _
  // Predicated region
  $region10: #{logistic_regression_forward.1} parent=0 // pred_check
    _
  $region11: #{logistic_regression_forward.1} parent=0 // pred_check_branch
    %16 = sbr.rel (0) target = $region13
  $region12: #{logistic_regression_forward.1} parent=0 // pred_region
    _
  $region13: #{logistic_regression_forward.1} parent=0 // pred_fallthru
    _
  // Predicated region
  $region14: #{logistic_regression_forward.1} parent=0 // pred_check
    _
  $region15: #{logistic_regression_forward.1} parent=0 // pred_check_branch
    %18 = sbr.rel (0) target = $region17
  $region16: #{logistic_regression_forward.1} parent=0 // pred_region
    _
  $region17: #{logistic_regression_forward.1} parent=0 // pred_fallthru
    _
  // Predicated region
  $region18: #{logistic_regression_forward.1} parent=0 // pred_check
    _
  $region19: #{logistic_regression_forward.1} parent=0 // pred_check_branch
    %20 = sbr.rel (0) target = $region21
  $region20: #{logistic_regression_forward.1} parent=0 // pred_region
    _
  $region21: #{logistic_regression_forward.1} parent=0 // pred_fallthru
    _
  %v21 = vld [vmem:[%s0] sm:$0xff]
  %v22 = vld [vmem:[%s1] sm:$0xff]
  %v23 = vld [vmem:[%s1 + $0x8] sm:$0xff]
  %v24 = vld [vmem:[%s1 + $0x10] sm:$0xff]
  %v25 = vld [vmem:[%s1 + $0x18] sm:$0xff]
  %v26 = vld [vmem:[%s1 + $0x20] sm:$0xff]
  %v27 = vld [vmem:[%s1 + $0x28] sm:$0xff]
  %v28 = vld [vmem:[%s1 + $0x30] sm:$0xff]
  %v29 = vld [vmem:[%s1 + $0x38] sm:$0xff]
  %v30 = vld [vmem:[%s1 + $0x40] sm:$0xff]
  %v31 = vld [vmem:[%s1 + $0x48] sm:$0xff]
  %v32 = vld [vmem:[%s1 + $0x50] sm:$0xff]
  %v33 = vld [vmem:[%s1 + $0x58] sm:$0xff]
  %v34 = vld [vmem:[%s1 + $0x60] sm:$0xff]
  %v35 = vld [vmem:[%s1 + $0x68] sm:$0xff]
  %v36 = vld [vmem:[%s1 + $0x70] sm:$0xff]
  %v37 = vld [vmem:[%s1 + $0x78] sm:$0xff]
  %v38 = vld [vmem:[%s2] sm:$0xf]
  %v40 = vlaneseq
  %v41 = vshrl.u32 %v40, 7
  %v42 = vsub.s32 0, %v41
  %v43 = vrot.slane %v38, %v42
  %v44 = vlaneseq
  %v45 = vshrl.u32 %v44, 7
  %v46 = vsub.s32 1, %v45
  %v47 = vrot.slane %v38, %v46
  %v48 = vlaneseq
  %v49 = vshrl.u32 %v48, 7
  %v50 = vsub.s32 2, %v49
  %v51 = vrot.slane %v38, %v50
  %v52 = vlaneseq
  %v53 = vshrl.u32 %v52, 7
  %v54 = vsub.s32 3, %v53
  %v55 = vrot.slane %v38, %v54
  %vm60 = vcmask 261120
  %v62 = vsel %vm60, %v21, 0
  %64 = vmatprep.subr.mxu0 0.0
  %65 = vmatpush1.msra.mxu0 0.0
  %66 = vmatprep.subr.mxu0 0.0
  %67 = vmatpush1.msra.mxu0 0.0
  %68 = vmatprep.subr.mxu0 0.0
  %69 = vmatpush1.msra.mxu0 0.0
  %70 = vmatprep.subr.mxu0 0.0
  %71 = vmatpush1.msra.mxu0 0.0
  %72 = vmatprep.subr.mxu0 0.0
  %73 = vmatpush1.msra.mxu0 0.0
  %74 = vmatprep.subr.mxu0 0.0
  %75 = vmatpush1.msra.mxu0 0.0
  %76 = vmatprep.subr.mxu0 0.0
  %77 = vmatpush1.msra.mxu0 0.0
  %78 = vmatprep.subr.mxu0 0.0
  %79 = vmatpush1.msra.mxu0 0.0
  %80 = vmatprep.subr.mxu0 0.0
  %81 = vmatpush1.msra.mxu0 0.0
  %82 = vmatprep.subr.mxu0 0.0
  %83 = vmatpush1.msra.mxu0 0.0
  %84 = vmatprep.subr.mxu0 0.0
  %85 = vmatpush1.msra.mxu0 0.0
  %86 = vmatprep.subr.mxu0 0.0
  %87 = vmatpush1.msra.mxu0 0.0
  %88 = vmatprep.subr.mxu0 %v35
  %89 = vmatpush1.msra.mxu0 %v34
  %90 = vmatprep.subr.mxu0 %v31
  %91 = vmatpush1.msra.mxu0 %v30
  %92 = vmatprep.subr.mxu0 %v27
  %93 = vmatpush1.msra.mxu0 %v26
  %94 = vmatprep.subr.mxu0 %v23
  %95 = vmatpush1.msra.mxu0 %v22
  %96 = vmatprep.subr.mxu0 0.0
  %97 = vmatpush2.msra.mxu0 0.0
  %98 = vmatprep.subr.mxu0 0.0
  %99 = vmatpush2.msra.mxu0 0.0
  %100 = vmatprep.subr.mxu0 0.0
  %101 = vmatpush2.msra.mxu0 0.0
  %102 = vmatprep.subr.mxu0 0.0
  %103 = vmatpush2.msra.mxu0 0.0
  %104 = vmatprep.subr.mxu0 0.0
  %105 = vmatpush2.msra.mxu0 0.0
  %106 = vmatprep.subr.mxu0 0.0
  %107 = vmatpush2.msra.mxu0 0.0
  %108 = vmatprep.subr.mxu0 0.0
  %109 = vmatpush2.msra.mxu0 0.0
  %110 = vmatprep.subr.mxu0 0.0
  %111 = vmatpush2.msra.mxu0 0.0
  %112 = vmatprep.subr.mxu0 0.0
  %113 = vmatpush2.msra.mxu0 0.0
  %114 = vmatprep.subr.mxu0 0.0
  %115 = vmatpush2.msra.mxu0 0.0
  %116 = vmatprep.subr.mxu0 0.0
  %117 = vmatpush2.msra.mxu0 0.0
  %118 = vmatprep.subr.mxu0 0.0
  %119 = vmatpush2.msra.mxu0 0.0
  %120 = vmatprep.subr.mxu0 0.0
  %121 = vmatpush2.msra.mxu0 0.0
  %122 = vmatprep.subr.mxu0 0.0
  %123 = vmatpush2.msra.mxu0 0.0
  %124 = vmatprep.subr.mxu0 0.0
  %125 = vmatpush2.msra.mxu0 0.0
  %126 = vmatprep.subr.mxu0 0.0
  %127 = vmatpush2.msra.mxu0 0.0
  %128 = vmatprep.mubr.f32.mxu0 0.0
  %129 = vmatmul.mubr.f32.gmra.mxu0 %v62
  %v130 = vpop.f32.mrf.mxu0
  %v131 = vadd.f32 %v43, %v130
  %v132 = vpop.f32.mrf.mxu0
  %v133 = vadd.f32 %v47, %v132
  %134 = vdwg.mxu0
  %135 = vmatprep.subr.mxu0 0.0
  %136 = vmatpush1.msra.mxu0 0.0
  %137 = vmatprep.subr.mxu0 0.0
  %138 = vmatpush1.msra.mxu0 0.0
  %139 = vmatprep.subr.mxu0 0.0
  %140 = vmatpush1.msra.mxu0 0.0
  %141 = vmatprep.subr.mxu0 0.0
  %142 = vmatpush1.msra.mxu0 0.0
  %143 = vmatprep.subr.mxu0 0.0
  %144 = vmatpush1.msra.mxu0 0.0
  %145 = vmatprep.subr.mxu0 0.0
  %146 = vmatpush1.msra.mxu0 0.0
  %147 = vmatprep.subr.mxu0 0.0
  %148 = vmatpush1.msra.mxu0 0.0
  %149 = vmatprep.subr.mxu0 0.0
  %150 = vmatpush1.msra.mxu0 0.0
  %151 = vmatprep.subr.mxu0 0.0
  %152 = vmatpush1.msra.mxu0 0.0
  %153 = vmatprep.subr.mxu0 0.0
  %154 = vmatpush1.msra.mxu0 0.0
  %155 = vmatprep.subr.mxu0 0.0
  %156 = vmatpush1.msra.mxu0 0.0
  %157 = vmatprep.subr.mxu0 0.0
  %158 = vmatpush1.msra.mxu0 0.0
  %159 = vmatprep.subr.mxu0 %v37
  %160 = vmatpush1.msra.mxu0 %v36
  %161 = vmatprep.subr.mxu0 %v33
  %162 = vmatpush1.msra.mxu0 %v32
  %163 = vmatprep.subr.mxu0 %v29
  %164 = vmatpush1.msra.mxu0 %v28
  %165 = vmatprep.subr.mxu0 %v25
  %166 = vmatpush1.msra.mxu0 %v24
  %167 = vmatprep.subr.mxu0 0.0
  %168 = vmatpush2.msra.mxu0 0.0
  %169 = vmatprep.subr.mxu0 0.0
  %170 = vmatpush2.msra.mxu0 0.0
  %171 = vmatprep.subr.mxu0 0.0
  %172 = vmatpush2.msra.mxu0 0.0
  %173 = vmatprep.subr.mxu0 0.0
  %174 = vmatpush2.msra.mxu0 0.0
  %175 = vmatprep.subr.mxu0 0.0
  %176 = vmatpush2.msra.mxu0 0.0
  %177 = vmatprep.subr.mxu0 0.0
  %178 = vmatpush2.msra.mxu0 0.0
  %179 = vmatprep.subr.mxu0 0.0
  %180 = vmatpush2.msra.mxu0 0.0
  %181 = vmatprep.subr.mxu0 0.0
  %182 = vmatpush2.msra.mxu0 0.0
  %183 = vmatprep.subr.mxu0 0.0
  %184 = vmatpush2.msra.mxu0 0.0
  %185 = vmatprep.subr.mxu0 0.0
  %186 = vmatpush2.msra.mxu0 0.0
  %187 = vmatprep.subr.mxu0 0.0
  %188 = vmatpush2.msra.mxu0 0.0
  %189 = vmatprep.subr.mxu0 0.0
  %190 = vmatpush2.msra.mxu0 0.0
  %191 = vmatprep.subr.mxu0 0.0
  %192 = vmatpush2.msra.mxu0 0.0
  %193 = vmatprep.subr.mxu0 0.0
  %194 = vmatpush2.msra.mxu0 0.0
  %195 = vmatprep.subr.mxu0 0.0
  %196 = vmatpush2.msra.mxu0 0.0
  %197 = vmatprep.subr.mxu0 0.0
  %198 = vmatpush2.msra.mxu0 0.0
  %199 = vmatprep.mubr.f32.mxu0 0.0
  %200 = vmatmul.mubr.f32.gmra.mxu0 %v62
  %v201 = vpop.f32.mrf.mxu0
  %v202 = vadd.f32 %v51, %v201
  %v203 = vpop.f32.mrf.mxu0
  %v204 = vadd.f32 %v55, %v203
  %205 = vdwg.mxu0
  %v206 = vmax.f32 %v131, 0.0
  %v207 = vmax.f32 %v133, 0.0
  %v208 = vmax.f32 %v202, 0.0
  %v209 = vmax.f32 %v204, 0.0
  %v210 = vld [vmem:[%s3] sm:$0xf]
  %v212 = vlaneseq
  %v213 = vshrl.u32 %v212, 7
  %v214 = vsub.s32 0, %v213
  %v215 = vrot.slane %v210, %v214
  %v216 = vlaneseq
  %v217 = vshrl.u32 %v216, 7
  %v218 = vsub.s32 1, %v217
  %v219 = vrot.slane %v210, %v218
  %v220 = vlaneseq
  %v221 = vshrl.u32 %v220, 7
  %v222 = vsub.s32 2, %v221
  %v223 = vrot.slane %v210, %v222
  %v224 = vlaneseq
  %v225 = vshrl.u32 %v224, 7
  %v226 = vsub.s32 3, %v225
  %v227 = vrot.slane %v210, %v226
  %v232 = vmul.f32 %v206, %v215
  %v233 = vmul.f32 %v207, %v219
  %v234 = vmul.f32 %v208, %v223
  %v235 = vmul.f32 %v209, %v227
  %v236 = vadd.f32 %v232, %v233
  %v237 = vadd.f32 %v236, %v234
  %v238 = vadd.f32 %v237, %v235
  %239 = vadd.xlane.f32.xlu0 %v238
  %v240 = vpop.xlane.xlu0 %239
  %s241 = sld [smem:[#allocation2]]
  %v242 = vstv %s241
  %v243 = vadd.f32 %v240, %v242
  %v244 = vsub.f32 0.0, %v243
  %v245 = vmul.f32 %v244, 1.442695
  %v246 = vpow.pop %v245
  %v247 = vadd.f32 %v246, 1.0
  %v248 = vrcp.pop %v247
  %v249 = vmul.f32 1.0, %v248
  %vm250 = vcmask 7168
  %251 = vst.msk [vmem:[%s5] sm:$0xff] %vm250, %v249
  // Predicated region
  $region22: #{logistic_regression_forward.1} parent=0 // pred_check
    _
  $region23: #{logistic_regression_forward.1} parent=0 // pred_check_branch
    %253 = sbr.rel (0) target = $region25
  $region24: #{logistic_regression_forward.1} parent=0 // pred_region
    _
  $region25: #{logistic_regression_forward.1} parent=0 // pred_fallthru
    _
  // Predicated region
  $region26: #{logistic_regression_forward.1} parent=0 // pred_check
    _
  $region27: #{logistic_regression_forward.1} parent=0 // pred_check_branch
    %255 = sbr.rel (0) target = $region29
  $region28: #{logistic_regression_forward.1} parent=0 // pred_region
    _
  $region29: #{logistic_regression_forward.1} parent=0 // pred_fallthru
    _

</llo_original>
